<compile_context>
chip_gen: v7x
topology: tpu7x:2x2x1
jax: 0.10.0
libtpu: 0.0.40
codegen_flags: <defaults>
</compile_context>

<pallas_src>
import functools

import jax
import jax.numpy as jnp
from jax.experimental import pallas as pl
from jax.experimental.pallas import tpu as pltpu


def _round_up(x, m):
    return ((x + m - 1) // m) * m


# ----------------------------------------------------------------------------
# Pallas kernel: one batch tile of the decoder MLP.
#   x_ref : (TB, WPAD)          zero-padded input tile (latent in [:, :L])
#   p_ref : (2*WPAD + 16, WPAD) packed params:
#             rows [0      : WPAD)      -> W_hidden (L, H) zero-padded
#             rows [WPAD   : 2*WPAD)    -> W_fc     (H, D) zero-padded
#             row  [2*WPAD]             -> b_hidden (H,)   zero-padded
#             row  [2*WPAD + 8]         -> b_fc     (D,)   zero-padded
#   o_ref : (TB, WPAD)          zero-padded output tile (result in [:, :D])
# ----------------------------------------------------------------------------
def vae_decoder_kernel(x_ref, p_ref, o_ref, *, wpad):
    x = x_ref[...]                                    # (TB, WPAD)

    w_h = p_ref[0:wpad, :]                            # (WPAD, WPAD)
    w_fc = p_ref[wpad:2 * wpad, :]                    # (WPAD, WPAD)
    b_h = p_ref[2 * wpad:2 * wpad + 1, :]             # (1, WPAD)
    b_fc = p_ref[2 * wpad + 8:2 * wpad + 9, :]        # (1, WPAD)

    # hidden = tanh(x @ W_h + b_h)
    h = jnp.tanh(jnp.dot(x, w_h, preferred_element_type=jnp.float32) + b_h)
    # out = hidden @ W_fc + b_fc
    y = jnp.dot(h, w_fc, preferred_element_type=jnp.float32) + b_fc

    o_ref[...] = y.astype(o_ref.dtype)


# ----------------------------------------------------------------------------
# Wrapper: pad input to a lane-dense tile, run the batch-tiled kernel, slice
# the real output back out.
# ----------------------------------------------------------------------------
@functools.partial(jax.jit, static_argnames=("latent_dim", "output_dim", "wpad"))
def vae_decoder_forward(x, packed_params, *, latent_dim, output_dim, wpad):
    B = x.shape[0]
    TB = min(512, _round_up(B, 8))          # batch tile (multiple of 8 sublanes)
    Bp = _round_up(B, TB)

    # Zero-pad: padded lanes hit zero-padded weight rows, so the result in the
    # real columns is exact.
    x_pad = jnp.zeros((Bp, wpad), jnp.float32).at[:B, :latent_dim].set(
        x.astype(jnp.float32))

    grid = (Bp // TB,)
    flops = 2 * 2 * Bp * wpad * wpad                       # two (Bp,WPAD)x(WPAD,WPAD) matmuls
    bytes_accessed = 4 * (2 * Bp * wpad + packed_params.size)

    out_pad = pl.pallas_call(
        functools.partial(vae_decoder_kernel, wpad=wpad),
        out_shape=jax.ShapeDtypeStruct((Bp, wpad), jnp.float32),
        grid_spec=pltpu.PrefetchScalarGridSpec(
            num_scalar_prefetch=0,
            grid=grid,
            in_specs=[
                pl.BlockSpec((TB, wpad), lambda i: (i, 0)),          # x tile
                pl.BlockSpec(packed_params.shape, lambda i: (0, 0)),  # resident params
            ],
            out_specs=pl.BlockSpec((TB, wpad), lambda i: (i, 0)),
        ),
        compiler_params=pltpu.CompilerParams(
            dimension_semantics=("parallel",),   # shard batch tiles across TCs on v7x
        ),
        cost_estimate=pl.CostEstimate(
            flops=flops,
            transcendentals=Bp * wpad,
            bytes_accessed=bytes_accessed,
        ),
    )(x_pad, packed_params)

    return out_pad[:B, :output_dim]


# ----------------------------------------------------------------------------
# Parameter init matching torch.nn.init.trunc_normal_(w, 0, 0.01) (+/- 2 std)
# and zero biases, followed by one-time packing into a single lane-dense buffer.
# ----------------------------------------------------------------------------
def trunc_normal(key, shape, std=0.01):
    return std * jax.random.truncated_normal(key, -2.0, 2.0, shape, jnp.float32)


def init_decoder_params(key, latent_dim, output_dim, hidden_dim=32):
    k1, k2 = jax.random.split(key)
    return {
        "w_h": trunc_normal(k1, (latent_dim, hidden_dim)),   # (L, H) == torch W.T
        "b_h": jnp.zeros((hidden_dim,), jnp.float32),
        "w_fc": trunc_normal(k2, (hidden_dim, output_dim)),  # (H, D) == torch W.T
        "b_fc": jnp.zeros((output_dim,), jnp.float32),
    }


def pack_decoder_params(p, latent_dim, output_dim, hidden_dim, wpad):
    """One-time coalescing of all weights/biases into one (2*WPAD+16, WPAD) buffer."""
    rows = 2 * wpad + 16
    buf = jnp.zeros((rows, wpad), jnp.float32)
    buf = buf.at[0:latent_dim, 0:hidden_dim].set(p["w_h"])
    buf = buf.at[wpad:wpad + hidden_dim, 0:output_dim].set(p["w_fc"])
    buf = buf.at[2 * wpad, 0:hidden_dim].set(p["b_h"])
    buf = buf.at[2 * wpad + 8, 0:output_dim].set(p["b_fc"])
    return buf


def vae_decoder_ref(x, p):
    """Pure-JAX reference for correctness checking."""
    h = jnp.tanh(x @ p["w_h"] + p["b_h"])
    return h @ p["w_fc"] + p["b_fc"]


if __name__ == "__main__":
    # Small shapes consistent with VAE_Decoder(latent_dim, output_dim, hidden_dim=32)
    B, LATENT_DIM, OUTPUT_DIM, HIDDEN_DIM = 8, 8, 16, 32
    WPAD = _round_up(max(LATENT_DIM, OUTPUT_DIM, HIDDEN_DIM), 128)  # common lane width

    root = jax.random.PRNGKey(0)
    k_params, k_x = jax.random.split(root, 2)

    params = init_decoder_params(k_params, LATENT_DIM, OUTPUT_DIM, HIDDEN_DIM)
    packed = pack_decoder_params(params, LATENT_DIM, OUTPUT_DIM, HIDDEN_DIM, WPAD)

    x = jax.random.normal(k_x, (B, LATENT_DIM), jnp.float32)

    out = vae_decoder_forward(
        x, packed, latent_dim=LATENT_DIM, output_dim=OUTPUT_DIM, wpad=WPAD)
    jax.block_until_ready(out)

    # Sanity check vs pure-JAX reference.
    ref = vae_decoder_ref(x, params)
    assert out.shape == (B, OUTPUT_DIM)
    assert jnp.allclose(out, ref, atol=1e-5), float(jnp.max(jnp.abs(out - ref)))

    print("KERNEL_OK")
</pallas_src>

<mosaic_0001>
module attributes {stable_mosaic.version = 11 : i64} {
  func.func @vae_decoder_kernel(%arg0: i32, %arg1: memref<8x128xf32, #tpu.memory_space<vmem>>, %arg2: memref<272x128xf32, #tpu.memory_space<vmem>>, %arg3: memref<8x128xf32, #tpu.memory_space<vmem>>) attributes {dimension_semantics = [#tpu.dimension_semantics<parallel>], iteration_bounds = array<i64: 1>, scalar_prefetch = 0 : i64, scratch_operands = 0 : i64, tpu.core_type = #tpu.core_type<tc>, window_params = [{transform_indices = @transform_0, window_bounds = array<i64: 8, 128>}, {pipeline_mode = #tpu.pipeline_mode<synchronous>, transform_indices = @transform_1, window_bounds = array<i64: 272, 128>}, {transform_indices = @transform_2, window_bounds = array<i64: 8, 128>}]} {
    %c0 = arith.constant 0 : index
    %c0_0 = arith.constant 0 : index
    %0 = vector.load %arg1[%c0, %c0_0] : memref<8x128xf32, #tpu.memory_space<vmem>>, vector<8x128xf32>
    %c0_1 = arith.constant 0 : index
    %c0_2 = arith.constant 0 : index
    %1 = vector.load %arg2[%c0_1, %c0_2] : memref<272x128xf32, #tpu.memory_space<vmem>>, vector<128x128xf32>
    %c128 = arith.constant 128 : index
    %c0_3 = arith.constant 0 : index
    %2 = vector.load %arg2[%c128, %c0_3] : memref<272x128xf32, #tpu.memory_space<vmem>>, vector<128x128xf32>
    %c256 = arith.constant 256 : index
    %c0_4 = arith.constant 0 : index
    %3 = vector.load %arg2[%c256, %c0_4] : memref<272x128xf32, #tpu.memory_space<vmem>>, vector<1x128xf32>
    %c264 = arith.constant 264 : index
    %c0_5 = arith.constant 0 : index
    %4 = vector.load %arg2[%c264, %c0_5] : memref<272x128xf32, #tpu.memory_space<vmem>>, vector<1x128xf32>
    %cst = arith.constant dense<0.000000e+00> : vector<8x128xf32>
    %5 = tpu.matmul %0, %1, %cst {dimension_numbers = #tpu.dot_dimension_numbers<[1], [0], [0], [1], [0, 0, 1, 1], [], []>} : vector<8x128xf32>, vector<128x128xf32>, vector<8x128xf32> -> vector<8x128xf32>
    %6 = vector.broadcast %3 : vector<1x128xf32> to vector<8x128xf32>
    %7 = arith.addf %5, %6 : vector<8x128xf32>
    %8 = math.tanh %7 : vector<8x128xf32>
    %cst_6 = arith.constant dense<0.000000e+00> : vector<8x128xf32>
    %9 = tpu.matmul %8, %2, %cst_6 {dimension_numbers = #tpu.dot_dimension_numbers<[1], [0], [0], [1], [0, 0, 1, 1], [], []>} : vector<8x128xf32>, vector<128x128xf32>, vector<8x128xf32> -> vector<8x128xf32>
    %10 = vector.broadcast %4 : vector<1x128xf32> to vector<8x128xf32>
    %11 = arith.addf %9, %10 : vector<8x128xf32>
    %c0_7 = arith.constant 0 : index
    %c0_8 = arith.constant 0 : index
    %12 = vector.load %arg3[%c0_7, %c0_8] : memref<8x128xf32, #tpu.memory_space<vmem>>, vector<8x128xf32>
    tpu.vector_store %arg3[%c0_7, %c0_8], %11 {strides = array<i32>} : memref<8x128xf32, #tpu.memory_space<vmem>>, vector<8x128xf32>,
    return
  }
  func.func @transform_0(%arg0: i32) -> (i32, i32) {
    %c0_i32 = arith.constant 0 : i32
    %c0_i32_0 = arith.constant 0 : i32
    return %arg0, %c0_i32 : i32, i32
  }
  func.func @transform_1(%arg0: i32) -> (i32, i32) {
    %c0_i32 = arith.constant 0 : i32
    %c0_i32_0 = arith.constant 0 : i32
    %c0_i32_1 = arith.constant 0 : i32
    return %c0_i32, %c0_i32_0 : i32, i32
  }
  func.func @transform_2(%arg0: i32) -> (i32, i32) {
    %c0_i32 = arith.constant 0 : i32
    %c0_i32_0 = arith.constant 0 : i32
    return %arg0, %c0_i32 : i32, i32
  }
}

</mosaic_0001>

<llo_original>
// kernel: vae_decoder_forward.1
$region0: #{vae_decoder_forward.1}
  #allocation0 [shape = 'u32[]', space=smem, size = 0x4, offset = 0x4, fixed_abs, tag = 'smem constant byte address 0x4 - core index']
  #allocation1 [shape = 'u32[144,128]{1,0:T(1,128)}', space=vmem, size = 0x12000, scoped, tag = 'internal scratch']
  %s0 = inlined_call_operand.vmem [shape: f32[8,128], index: 0, kind: input, shape index: {}]
  %s1 = inlined_call_operand.hbm [shape: f32[272,128], index: 1, kind: input, shape index: {}]
  %s2 = inlined_call_operand.hbm [shape: f32[8,128], index: 2, kind: output, shape index: {}]
  %s3 = sld [smem:[#allocation0]]
  $region22: #{vae_decoder_forward.1} parent=0
    _
  %s5 = ssub.s32 1, %s3
  %s6 = scalar_select 0, %s5, %s3
  $region1: #{vae_decoder_forward.1} parent=0
    #allocation2 [shape = 'u8[139264]{0}', space=vmem, size = 0x22000, scoped, tag = 'input window, operand 1, single buffered']
    #allocation3 [shape = 's32[1]{0}', space=sflag, size = 0x4, scoped, tag = 'scoped memory for vae_decoder_forward.1']
    #allocation4 [shape = 's32[1]{0}', space=sflag, size = 0x4, scoped, tag = 'scoped memory for vae_decoder_forward.1']
    #allocation5 [shape = 'u8[4096]{0}', space=vmem, size = 0x1000, scoped, tag = 'output window, operand 0, single buffered']
    %7 = vsyncpa [#allocation3], 0
    %8 = vsyncpa [#allocation4], 0
    // Predicated region
    $region2: #{vae_decoder_forward.1} parent=1 // pred_check
      _
    $region3: #{vae_decoder_forward.1} parent=1 // pred_check_branch
      %10 = sbr.rel (0) target = $region5
    $region4: #{vae_decoder_forward.1} parent=1 // pred_region
      _
    $region5: #{vae_decoder_forward.1} parent=1 // pred_fallthru
      _
    // Predicated region
    $region6: #{vae_decoder_forward.1} parent=1 // pred_check
      _
    $region7: #{vae_decoder_forward.1} parent=1 // pred_check_branch
      %12 = sbr.rel (0) target = $region9
    $region8: #{vae_decoder_forward.1} parent=1 // pred_region
      %s14 = ssub.s32 4352, 4352
      %15 = vsyncadd [#allocation3], %s14
      %s16 = sshll.u32 [#allocation2], 4
      %s17 = int_to_ptr.vmem [resolvable:$true] %s16
      %22 = dma.hbm_to_vmem [thread:$0]  %s1, 4352, %s17, [#allocation3], 128, 128, 8
    $region9: #{vae_decoder_forward.1} parent=1 // pred_fallthru
      _
    // Predicated region
    $region10: #{vae_decoder_forward.1} parent=1 // pred_check
      _
    $region11: #{vae_decoder_forward.1} parent=1 // pred_check_branch
      %24 = sbr.rel (0) target = $region13
    $region12: #{vae_decoder_forward.1} parent=1 // pred_region
      %25 = dma.done [#allocation3], 4352
    $region13: #{vae_decoder_forward.1} parent=1 // pred_fallthru
      _
    %v26 = vld [vmem:[%s0] sm:$0xff]
    %v27 = vld [vmem:[#allocation2] sm:$0xff]
    %v28 = vld [vmem:[#allocation2 + $0x8] sm:$0xff]
    %v29 = vld [vmem:[#allocation2 + $0x10] sm:$0xff]
    %v30 = vld [vmem:[#allocation2 + $0x18] sm:$0xff]
    %v31 = vld [vmem:[#allocation2 + $0x20] sm:$0xff]
    %v32 = vld [vmem:[#allocation2 + $0x28] sm:$0xff]
    %v33 = vld [vmem:[#allocation2 + $0x30] sm:$0xff]
    %v34 = vld [vmem:[#allocation2 + $0x38] sm:$0xff]
    %v35 = vld [vmem:[#allocation2 + $0x40] sm:$0xff]
    %v36 = vld [vmem:[#allocation2 + $0x48] sm:$0xff]
    %v37 = vld [vmem:[#allocation2 + $0x50] sm:$0xff]
    %v38 = vld [vmem:[#allocation2 + $0x58] sm:$0xff]
    %v39 = vld [vmem:[#allocation2 + $0x60] sm:$0xff]
    %v40 = vld [vmem:[#allocation2 + $0x68] sm:$0xff]
    %v41 = vld [vmem:[#allocation2 + $0x70] sm:$0xff]
    %v42 = vld [vmem:[#allocation2 + $0x78] sm:$0xff]
    %v43 = vld [vmem:[#allocation2 + $0x80] sm:$0xff]
    %v44 = vld [vmem:[#allocation2 + $0x88] sm:$0xff]
    %v45 = vld [vmem:[#allocation2 + $0x90] sm:$0xff]
    %v46 = vld [vmem:[#allocation2 + $0x98] sm:$0xff]
    %v47 = vld [vmem:[#allocation2 + $0xa0] sm:$0xff]
    %v48 = vld [vmem:[#allocation2 + $0xa8] sm:$0xff]
    %v49 = vld [vmem:[#allocation2 + $0xb0] sm:$0xff]
    %v50 = vld [vmem:[#allocation2 + $0xb8] sm:$0xff]
    %v51 = vld [vmem:[#allocation2 + $0xc0] sm:$0xff]
    %v52 = vld [vmem:[#allocation2 + $0xc8] sm:$0xff]
    %v53 = vld [vmem:[#allocation2 + $0xd0] sm:$0xff]
    %v54 = vld [vmem:[#allocation2 + $0xd8] sm:$0xff]
    %v55 = vld [vmem:[#allocation2 + $0xe0] sm:$0xff]
    %v56 = vld [vmem:[#allocation2 + $0xe8] sm:$0xff]
    %v57 = vld [vmem:[#allocation2 + $0xf0] sm:$0xff]
    %v58 = vld [vmem:[#allocation2 + $0xf8] sm:$0xff]
    %v59 = vld [vmem:[#allocation2 + $0x100] sm:$0x1]
    %v60 = vld [vmem:[#allocation2 + $0x108] sm:$0x1]
    %v61 = vlaneseq
    %v62 = vshrl.u32 %v61, 7
    %v63 = vsub.s32 0, %v62
    %v64 = vrot.slane %v59, %v63
    %65 = vmatprep.subr.mxu0 0.0
    %66 = vmatpush1.msra.mxu0 %v27
    %67 = vmatprep.subr.mxu0 0.0
    %68 = vmatpush1.msra.mxu0 %v28
    %69 = vmatprep.subr.mxu0 0.0
    %70 = vmatpush1.msra.mxu0 %v29
    %71 = vmatprep.subr.mxu0 0.0
    %72 = vmatpush1.msra.mxu0 %v30
    %73 = vmatprep.subr.mxu0 0.0
    %74 = vmatpush1.msra.mxu0 %v31
    %75 = vmatprep.subr.mxu0 0.0
    %76 = vmatpush1.msra.mxu0 %v32
    %77 = vmatprep.subr.mxu0 0.0
    %78 = vmatpush1.msra.mxu0 %v33
    %79 = vmatprep.subr.mxu0 0.0
    %80 = vmatpush1.msra.mxu0 %v34
    %81 = vmatprep.subr.mxu0 0.0
    %82 = vmatpush1.msra.mxu0 %v35
    %83 = vmatprep.subr.mxu0 0.0
    %84 = vmatpush1.msra.mxu0 %v36
    %85 = vmatprep.subr.mxu0 0.0
    %86 = vmatpush1.msra.mxu0 %v37
    %87 = vmatprep.subr.mxu0 0.0
    %88 = vmatpush1.msra.mxu0 %v38
    %89 = vmatprep.subr.mxu0 0.0
    %90 = vmatpush1.msra.mxu0 %v39
    %91 = vmatprep.subr.mxu0 0.0
    %92 = vmatpush1.msra.mxu0 %v40
    %93 = vmatprep.subr.mxu0 0.0
    %94 = vmatpush1.msra.mxu0 %v41
    %95 = vmatprep.subr.mxu0 0.0
    %96 = vmatpush1.msra.mxu0 %v42
    %97 = vmatprep.subr.mxu0 0.0
    %98 = vmatpush1.msra.mxu0 0.0
    %99 = vmatprep.subr.mxu0 0.0
    %100 = vmatpush1.msra.mxu0 0.0
    %101 = vmatprep.subr.mxu0 0.0
    %102 = vmatpush1.msra.mxu0 0.0
    %103 = vmatprep.subr.mxu0 0.0
    %104 = vmatpush1.msra.mxu0 0.0
    %105 = vmatprep.subr.mxu0 0.0
    %106 = vmatpush1.msra.mxu0 0.0
    %107 = vmatprep.subr.mxu0 0.0
    %108 = vmatpush1.msra.mxu0 0.0
    %109 = vmatprep.subr.mxu0 0.0
    %110 = vmatpush1.msra.mxu0 0.0
    %111 = vmatprep.subr.mxu0 0.0
    %112 = vmatpush1.msra.mxu0 0.0
    %113 = vmatprep.subr.mxu0 0.0
    %114 = vmatpush1.msra.mxu0 0.0
    %115 = vmatprep.subr.mxu0 0.0
    %116 = vmatpush1.msra.mxu0 0.0
    %117 = vmatprep.subr.mxu0 0.0
    %118 = vmatpush1.msra.mxu0 0.0
    %119 = vmatprep.subr.mxu0 0.0
    %120 = vmatpush1.msra.mxu0 0.0
    %121 = vmatprep.subr.mxu0 0.0
    %122 = vmatpush1.msra.mxu0 0.0
    %123 = vmatprep.subr.mxu0 0.0
    %124 = vmatpush1.msra.mxu0 0.0
    %125 = vmatprep.subr.mxu0 0.0
    %126 = vmatpush1.msra.mxu0 0.0
    %127 = vmatprep.subr.mxu0 0.0
    %128 = vmatpush1.msra.mxu0 0.0
    %129 = vmatprep.mubr.f32.mxu0 0.0
    %130 = vmatmul.mubr.f32.gmra.mrb[0].mxu0 %v26
    %v131 = vpop.f32.mrb[0].mxu0
    %v132 = vadd.f32 %v64, %v131
    %v133 = vpop.f32.mrb[0].mxu0
    %134 = vdwg.mxu0
    %v135 = vtanh.pop %v132
    %v136 = vlaneseq
    %v137 = vshrl.u32 %v136, 7
    %v138 = vsub.s32 0, %v137
    %v139 = vrot.slane %v60, %v138
    %140 = vmatprep.subr.mxu0 0.0
    %141 = vmatpush1.msra.mxu0 %v43
    %142 = vmatprep.subr.mxu0 0.0
    %143 = vmatpush1.msra.mxu0 %v44
    %144 = vmatprep.subr.mxu0 0.0
    %145 = vmatpush1.msra.mxu0 %v45
    %146 = vmatprep.subr.mxu0 0.0
    %147 = vmatpush1.msra.mxu0 %v46
    %148 = vmatprep.subr.mxu0 0.0
    %149 = vmatpush1.msra.mxu0 %v47
    %150 = vmatprep.subr.mxu0 0.0
    %151 = vmatpush1.msra.mxu0 %v48
    %152 = vmatprep.subr.mxu0 0.0
    %153 = vmatpush1.msra.mxu0 %v49
    %154 = vmatprep.subr.mxu0 0.0
    %155 = vmatpush1.msra.mxu0 %v50
    %156 = vmatprep.subr.mxu0 0.0
    %157 = vmatpush1.msra.mxu0 %v51
    %158 = vmatprep.subr.mxu0 0.0
    %159 = vmatpush1.msra.mxu0 %v52
    %160 = vmatprep.subr.mxu0 0.0
    %161 = vmatpush1.msra.mxu0 %v53
    %162 = vmatprep.subr.mxu0 0.0
    %163 = vmatpush1.msra.mxu0 %v54
    %164 = vmatprep.subr.mxu0 0.0
    %165 = vmatpush1.msra.mxu0 %v55
    %166 = vmatprep.subr.mxu0 0.0
    %167 = vmatpush1.msra.mxu0 %v56
    %168 = vmatprep.subr.mxu0 0.0
    %169 = vmatpush1.msra.mxu0 %v57
    %170 = vmatprep.subr.mxu0 0.0
    %171 = vmatpush1.msra.mxu0 %v58
    %172 = vmatprep.subr.mxu0 0.0
    %173 = vmatpush1.msra.mxu0 0.0
    %174 = vmatprep.subr.mxu0 0.0
    %175 = vmatpush1.msra.mxu0 0.0
    %176 = vmatprep.subr.mxu0 0.0
    %177 = vmatpush1.msra.mxu0 0.0
    %178 = vmatprep.subr.mxu0 0.0
    %179 = vmatpush1.msra.mxu0 0.0
    %180 = vmatprep.subr.mxu0 0.0
    %181 = vmatpush1.msra.mxu0 0.0
    %182 = vmatprep.subr.mxu0 0.0
    %183 = vmatpush1.msra.mxu0 0.0
    %184 = vmatprep.subr.mxu0 0.0
    %185 = vmatpush1.msra.mxu0 0.0
    %186 = vmatprep.subr.mxu0 0.0
    %187 = vmatpush1.msra.mxu0 0.0
    %188 = vmatprep.subr.mxu0 0.0
    %189 = vmatpush1.msra.mxu0 0.0
    %190 = vmatprep.subr.mxu0 0.0
    %191 = vmatpush1.msra.mxu0 0.0
    %192 = vmatprep.subr.mxu0 0.0
    %193 = vmatpush1.msra.mxu0 0.0
    %194 = vmatprep.subr.mxu0 0.0
    %195 = vmatpush1.msra.mxu0 0.0
    %196 = vmatprep.subr.mxu0 0.0
    %197 = vmatpush1.msra.mxu0 0.0
    %198 = vmatprep.subr.mxu0 0.0
    %199 = vmatpush1.msra.mxu0 0.0
    %200 = vmatprep.subr.mxu0 0.0
    %201 = vmatpush1.msra.mxu0 0.0
    %202 = vmatprep.subr.mxu0 0.0
    %203 = vmatpush1.msra.mxu0 0.0
    %204 = vmatprep.mubr.f32.mxu0 0.0
    %205 = vmatmul.mubr.f32.gmra.mrb[0].mxu0 %v135
    %v206 = vpop.f32.mrb[0].mxu0
    %v207 = vadd.f32 %v139, %v206
    %v208 = vpop.f32.mrb[0].mxu0
    %209 = vdwg.mxu0
    %210 = vst [vmem:[#allocation5] sm:$0xff] %v207
    // Predicated region
    $region14: #{vae_decoder_forward.1} parent=1 // pred_check
      _
    $region15: #{vae_decoder_forward.1} parent=1 // pred_check_branch
      %212 = sbr.rel (0) target = $region17
    $region16: #{vae_decoder_forward.1} parent=1 // pred_region
      %s214 = ssub.s32 128, 128
      %215 = vsyncadd [#allocation4], %s214
      %s217 = sshll.u32 [#allocation5], 4
      %s218 = int_to_ptr.vmem [resolvable:$true] %s217
      %220 = dma.vmem_to_hbm [thread:$0]  %s218, 128, %s2, [#allocation4]
    $region17: #{vae_decoder_forward.1} parent=1 // pred_fallthru
      _
    // Predicated region
    $region18: #{vae_decoder_forward.1} parent=1 // pred_check
      _
    $region19: #{vae_decoder_forward.1} parent=1 // pred_check_branch
      %222 = sbr.rel (0) target = $region21
    $region20: #{vae_decoder_forward.1} parent=1 // pred_region
      %223 = dma.done [#allocation4], 128
    $region21: #{vae_decoder_forward.1} parent=1 // pred_fallthru
      _
    %224 = vsyncpa [#allocation3], 1
    %225 = vsyncpa [#allocation4], 1

</llo_original>
